<compile_context>
chip_gen: v7x
topology: tpu7x:2x2x1
jax: 0.10.0
libtpu: 0.0.40
codegen_flags: <defaults>
</compile_context>

<pallas_src>
import functools

import jax
import jax.numpy as jnp
from jax.experimental import pallas as pl
from jax.experimental.pallas import tpu as pltpu

EPS = 1e-9


def _l1_masked_kernel(inp_ref, tgt_ref, out_ref, acc_ref, *,
                      n_total, hw_total, b_n, t_hw,
                      need_n_mask, need_hw_mask):
    j = pl.program_id(1)          # inner (reduction) axis over H*W blocks

    @pl.when(j == 0)
    def _():
        acc_ref[...] = jnp.zeros_like(acc_ref)

    x = inp_ref[...].astype(jnp.float32)      # (b_n, C, t_hw)
    t = tgt_ref[...].astype(jnp.float32)      # (b_n, C, t_hw)

    # mask: per-(n, hw) channel sum > eps, broadcast back over channels.
    keep = jnp.sum(t, axis=1, keepdims=True) > EPS            # (b_n, 1, t_hw)

    # Mask out-of-bounds rows / lanes of boundary blocks (statically elided
    # when the shapes divide the tile sizes evenly).
    if need_n_mask:
        i = pl.program_id(0)
        n_idx = jax.lax.broadcasted_iota(jnp.int32, (b_n, 1, t_hw), 0) + i * b_n
        keep = jnp.logical_and(keep, n_idx < n_total)
    if need_hw_mask:
        hw_idx = jax.lax.broadcasted_iota(jnp.int32, (b_n, 1, t_hw), 2) + j * t_hw
        keep = jnp.logical_and(keep, hw_idx < hw_total)

    contrib = jnp.where(keep, jnp.abs(x - t), 0.0)            # (b_n, C, t_hw)
    # VPU-only accumulation: sum over the leading (untiled) axis.
    acc_ref[...] += jnp.sum(contrib, axis=0)                  # (C, t_hw)

    @pl.when(j == pl.num_programs(1) - 1)
    def _():
        total = jnp.sum(acc_ref[...])         # scalar, once per outer block
        out_ref[...] = jnp.full(out_ref.shape, total, dtype=out_ref.dtype)


def _pick_tiles(n, c, hw, itemsize, target_bytes=1 << 20):
    """Pick (b_n, t_hw) so one input block carries ~target_bytes of payload."""
    # Lane tile over H*W: full extent if small, else a multiple of 128.
    max_t_hw = max(128, (target_bytes // max(1, c * itemsize)) // 128 * 128)
    if hw <= max_t_hw:
        t_hw = hw                        # full extent: always a legal block dim
    else:
        t_hw = min(max_t_hw, 8192)       # 128-multiple chunk of H*W
    # Batch rows per block to reach the payload target.
    per_n_bytes = c * t_hw * itemsize
    b_n = int(max(1, min(n, target_bytes // max(1, per_n_bytes))))
    return b_n, t_hw


def l1_masked(input_nchw, target_nchw, *, block_bytes=1 << 20):
    """Masked L1 loss matching the PyTorch module's forward (mask=None path)."""
    # TODO(synk): the optional user-supplied `mask` argument of the PyTorch
    # module is not plumbed through; only the mask=None branch is implemented.
    assert input_nchw.shape == target_nchw.shape
    n, c, h, w = input_nchw.shape
    hw = h * w

    # Free, contiguous reshape (no transpose): NCHW -> (N, C, H*W).
    x3 = input_nchw.reshape(n, c, hw)
    t3 = target_nchw.reshape(n, c, hw)

    itemsize = jnp.dtype(x3.dtype).itemsize
    b_n, t_hw = _pick_tiles(n, c, hw, itemsize, target_bytes=block_bytes)

    g_n = pl.cdiv(n, b_n)
    g_hw = pl.cdiv(hw, t_hw)
    need_n_mask = (n % b_n) != 0
    need_hw_mask = (hw % t_hw) != 0
    total_elems = n * c * hw

    kernel = functools.partial(
        _l1_masked_kernel,
        n_total=n, hw_total=hw, b_n=b_n, t_hw=t_hw,
        need_n_mask=need_n_mask, need_hw_mask=need_hw_mask)

    cost = pl.CostEstimate(
        flops=5 * total_elems,
        transcendentals=0,
        bytes_accessed=2 * total_elems * itemsize + g_n * 8 * 128 * 4)

    partials = pl.pallas_call(
        kernel,
        out_shape=jax.ShapeDtypeStruct((g_n, 8, 128), jnp.float32),
        grid_spec=pltpu.PrefetchScalarGridSpec(
            num_scalar_prefetch=0,
            grid=(g_n, g_hw),
            in_specs=[
                pl.BlockSpec((b_n, c, t_hw), lambda i, j: (i, 0, j)),
                pl.BlockSpec((b_n, c, t_hw), lambda i, j: (i, 0, j)),
            ],
            out_specs=pl.BlockSpec((1, 8, 128), lambda i, j: (i, 0, 0)),
            scratch_shapes=[pltpu.VMEM((c, t_hw), jnp.float32)],
        ),
        compiler_params=pltpu.CompilerParams(
            dimension_semantics=("parallel", "arbitrary"),
            vmem_limit_bytes=32 * 1024 * 1024,
        ),
        cost_estimate=cost,
    )(x3, t3)

    # Each (8,128) slab carries one outer-block partial sum (broadcast).
    return jnp.sum(partials[:, 0, 0]) / jnp.float32(total_elems)


def _reference(input_nchw, target_nchw):
    mask = (jnp.sum(target_nchw, axis=1, keepdims=True) > EPS).astype(jnp.float32)
    return jnp.mean(jnp.abs(input_nchw * mask - target_nchw * mask))


if __name__ == "__main__":
    key = jax.random.PRNGKey(0)
    k1, k2, k3 = jax.random.split(key, 3)

    N, C, H, W = 2, 4, 16, 16
    inp = jax.random.normal(k1, (N, C, H, W), dtype=jnp.float32)
    tgt = jax.random.normal(k2, (N, C, H, W), dtype=jnp.float32)
    # zero out some spatial positions of target so the mask is non-trivial
    drop = jax.random.bernoulli(k3, p=0.3, shape=(N, 1, H, W))
    tgt = tgt * (1.0 - drop.astype(jnp.float32))

    loss = jax.block_until_ready(l1_masked(inp, tgt))
    ref = jax.block_until_ready(_reference(inp, tgt))

    assert jnp.allclose(loss, ref, rtol=1e-5, atol=1e-6), (loss, ref)
    print("KERNEL_OK")
</pallas_src>

<mosaic_0001>
module attributes {stable_mosaic.version = 11 : i64} {
  func.func @_l1_masked_kernel(%arg0: i32, %arg1: i32, %arg2: memref<2x4x256xf32, #tpu.memory_space<vmem>>, %arg3: memref<2x4x256xf32, #tpu.memory_space<vmem>>, %arg4: memref<1x8x128xf32, #tpu.memory_space<vmem>>, %arg5: memref<4x256xf32, #tpu.memory_space<vmem>>) attributes {dimension_semantics = [#tpu.dimension_semantics<parallel>, #tpu.dimension_semantics<arbitrary>], iteration_bounds = array<i64: 1, 1>, scalar_prefetch = 0 : i64, scratch_operands = 1 : i64, tpu.core_type = #tpu.core_type<tc>, window_params = [{transform_indices = @transform_0, window_bounds = array<i64: 2, 4, 256>}, {transform_indices = @transform_1, window_bounds = array<i64: 2, 4, 256>}, {transform_indices = @transform_2, window_bounds = array<i64: 1, 8, 128>}]} {
    %c0_i32 = arith.constant 0 : i32
    %0 = arith.cmpi eq, %arg1, %c0_i32 : i32
    %1 = arith.extui %0 : i1 to i32
    %c0_i32_0 = arith.constant 0 : i32
    %2 = arith.cmpi ne, %1, %c0_i32_0 : i32
    scf.if %2 {
      %cst_15 = arith.constant 0.000000e+00 : f32
      %22 = vector.broadcast %cst_15 : f32 to vector<4x256xf32>
      %c0_16 = arith.constant 0 : index
      %c0_17 = arith.constant 0 : index
      %23 = vector.load %arg5[%c0_16, %c0_17] : memref<4x256xf32, #tpu.memory_space<vmem>>, vector<4x256xf32>
      tpu.vector_store %arg5[%c0_16, %c0_17], %22 {strides = array<i32>} : memref<4x256xf32, #tpu.memory_space<vmem>>, vector<4x256xf32>,
    } else {
    }
    %c0 = arith.constant 0 : index
    %c0_1 = arith.constant 0 : index
    %c0_2 = arith.constant 0 : index
    %3 = vector.load %arg2[%c0, %c0_1, %c0_2] : memref<2x4x256xf32, #tpu.memory_space<vmem>>, vector<2x4x256xf32>
    %c0_3 = arith.constant 0 : index
    %c0_4 = arith.constant 0 : index
    %c0_5 = arith.constant 0 : index
    %4 = vector.load %arg3[%c0_3, %c0_4, %c0_5] : memref<2x4x256xf32, #tpu.memory_space<vmem>>, vector<2x4x256xf32>
    %cst = arith.constant dense<0.000000e+00> : vector<2x256xf32>
    %5 = vector.multi_reduction <add>, %4, %cst [1] : vector<2x4x256xf32> to vector<2x256xf32>
    %6 = vector.shape_cast %5 : vector<2x256xf32> to vector<2x1x256xf32>
    %cst_6 = arith.constant 9.99999971E-10 : f32
    %7 = vector.broadcast %cst_6 : f32 to vector<2x1x256xf32>
    %8 = arith.cmpf ogt, %6, %7 : vector<2x1x256xf32>
    %9 = arith.subf %3, %4 : vector<2x4x256xf32>
    %10 = math.absf %9 : vector<2x4x256xf32>
    %cst_7 = arith.constant 0.000000e+00 : f32
    %11 = vector.shape_cast %8 : vector<2x1x256xi1> to vector<2x1x256xi1>
    %12 = vector.broadcast %11 : vector<2x1x256xi1> to vector<2x4x256xi1>
    %13 = vector.broadcast %cst_7 : f32 to vector<2x4x256xf32>
    %14 = arith.select %12, %10, %13 : vector<2x4x256xi1>, vector<2x4x256xf32>
    %c0_8 = arith.constant 0 : index
    %c0_9 = arith.constant 0 : index
    %15 = vector.load %arg5[%c0_8, %c0_9] : memref<4x256xf32, #tpu.memory_space<vmem>>, vector<4x256xf32>
    %cst_10 = arith.constant dense<0.000000e+00> : vector<4x256xf32>
    %16 = vector.multi_reduction <add>, %14, %cst_10 [0] : vector<2x4x256xf32> to vector<4x256xf32>
    %17 = arith.addf %15, %16 : vector<4x256xf32>
    %c0_11 = arith.constant 0 : index
    %c0_12 = arith.constant 0 : index
    %18 = vector.load %arg5[%c0_11, %c0_12] : memref<4x256xf32, #tpu.memory_space<vmem>>, vector<4x256xf32>
    tpu.vector_store %arg5[%c0_11, %c0_12], %17 {strides = array<i32>} : memref<4x256xf32, #tpu.memory_space<vmem>>, vector<4x256xf32>,
    %c0_i32_13 = arith.constant 0 : i32
    %19 = arith.cmpi eq, %arg1, %c0_i32_13 : i32
    %20 = arith.extui %19 : i1 to i32
    %c0_i32_14 = arith.constant 0 : i32
    %21 = arith.cmpi ne, %20, %c0_i32_14 : i32
    scf.if %21 {
      %c0_15 = arith.constant 0 : index
      %c0_16 = arith.constant 0 : index
      %22 = vector.load %arg5[%c0_15, %c0_16] : memref<4x256xf32, #tpu.memory_space<vmem>>, vector<4x256xf32>
      %23 = vector.shape_cast %22 : vector<4x256xf32> to vector<1x4x256xf32>
      %cst_17 = arith.constant dense<0.000000e+00> : vector<1xf32>
      %24 = vector.multi_reduction <add>, %23, %cst_17 [1, 2] : vector<1x4x256xf32> to vector<1xf32>
      %25 = vector.shape_cast %24 : vector<1xf32> to vector<1x1x1xf32>
      %26 = vector.extract %25[0, 0, 0] : f32 from vector<1x1x1xf32>
      %27 = vector.broadcast %26 : f32 to vector<1x8x128xf32>
      %c0_18 = arith.constant 0 : index
      %c0_19 = arith.constant 0 : index
      %c0_20 = arith.constant 0 : index
      %28 = vector.load %arg4[%c0_18, %c0_19, %c0_20] : memref<1x8x128xf32, #tpu.memory_space<vmem>>, vector<1x8x128xf32>
      tpu.vector_store %arg4[%c0_18, %c0_19, %c0_20], %27 {strides = array<i32>} : memref<1x8x128xf32, #tpu.memory_space<vmem>>, vector<1x8x128xf32>,
    } else {
    }
    return
  }
  func.func @transform_0(%arg0: i32, %arg1: i32) -> (i32, i32, i32) {
    %c0_i32 = arith.constant 0 : i32
    %c0_i32_0 = arith.constant 0 : i32
    return %arg0, %c0_i32, %arg1 : i32, i32, i32
  }
  func.func @transform_1(%arg0: i32, %arg1: i32) -> (i32, i32, i32) {
    %c0_i32 = arith.constant 0 : i32
    %c0_i32_0 = arith.constant 0 : i32
    return %arg0, %c0_i32, %arg1 : i32, i32, i32
  }
  func.func @transform_2(%arg0: i32, %arg1: i32) -> (i32, i32, i32) {
    %c0_i32 = arith.constant 0 : i32
    %c0_i32_0 = arith.constant 0 : i32
    %c0_i32_1 = arith.constant 0 : i32
    return %arg0, %c0_i32, %c0_i32_0 : i32, i32, i32
  }
}

</mosaic_0001>

<llo_original>
// kernel: tpu_custom_call.1
$region0: #{tpu_custom_call.1}
  #allocation0 [shape = 'u32[]', space=smem, size = 0x4, offset = 0x4, fixed_abs, tag = 'smem constant byte address 0x4 - core index']
  #allocation1 [shape = 'u32[144,128]{1,0:T(1,128)}', space=vmem, size = 0x12000, scoped, tag = 'internal scratch']
  #allocation2 [shape = 'f32[4,256]{1,0:T(4,128)}', space=vmem, size = 0x1000, scoped, tag = 'scratch operand']
  %s0 = inlined_call_operand.hbm [shape: f32[2,4,256], index: 0, kind: input, shape index: {}]
  %s1 = inlined_call_operand.hbm [shape: f32[2,4,256], index: 1, kind: input, shape index: {}]
  %s2 = inlined_call_operand.hbm [shape: f32[1,8,128], index: 2, kind: output, shape index: {}]
  %s3 = sld [smem:[#allocation0]]
  $region34: #{tpu_custom_call.1} parent=0
    _
  %s5 = ssub.s32 1, %s3
  %s6 = scalar_select 0, %s5, %s3
  $region1: #{tpu_custom_call.1} parent=0
    #allocation3 [shape = 'u8[8192]{0}', space=vmem, size = 0x2000, scoped, tag = 'input window, operand 0, single buffered']
    #allocation4 [shape = 's32[1]{0}', space=sflag, size = 0x4, scoped, tag = 'scoped memory for tpu_custom_call.1']
    #allocation5 [shape = 's32[1]{0}', space=sflag, size = 0x4, scoped, tag = 'scoped memory for tpu_custom_call.1']
    #allocation6 [shape = 'u8[8192]{0}', space=vmem, size = 0x2000, scoped, tag = 'input window, operand 1, single buffered']
    #allocation7 [shape = 's32[1]{0}', space=sflag, size = 0x4, scoped, tag = 'scoped memory for tpu_custom_call.1']
    #allocation8 [shape = 'u8[4096]{0}', space=vmem, size = 0x1000, scoped, tag = 'output window, operand 0, single buffered']
    %7 = vsyncpa [#allocation4], 0
    %8 = vsyncpa [#allocation7], 0
    %9 = vsyncpa [#allocation5], 0
    // Predicated region
    $region2: #{tpu_custom_call.1} parent=1 // pred_check
      _
    $region3: #{tpu_custom_call.1} parent=1 // pred_check_branch
      %11 = sbr.rel (0) target = $region5
    $region4: #{tpu_custom_call.1} parent=1 // pred_region
      %s13 = ssub.s32 256, 256
      %14 = vsyncadd [#allocation4], %s13
      %s15 = sshll.u32 [#allocation3], 4
      %s16 = int_to_ptr.vmem [resolvable:$true] %s15
      %21 = dma.hbm_to_vmem [thread:$0]  %s0, 256, %s16, [#allocation4], 128, 128, 8
    $region5: #{tpu_custom_call.1} parent=1 // pred_fallthru
      _
    // Predicated region
    $region6: #{tpu_custom_call.1} parent=1 // pred_check
      _
    $region7: #{tpu_custom_call.1} parent=1 // pred_check_branch
      %23 = sbr.rel (0) target = $region9
    $region8: #{tpu_custom_call.1} parent=1 // pred_region
      %s25 = ssub.s32 256, 256
      %26 = vsyncadd [#allocation7], %s25
      %s27 = sshll.u32 [#allocation6], 4
      %s28 = int_to_ptr.vmem [resolvable:$true] %s27
      %33 = dma.hbm_to_vmem [thread:$0]  %s1, 256, %s28, [#allocation7], 128, 128, 8
    $region9: #{tpu_custom_call.1} parent=1 // pred_fallthru
      _
    // Predicated region
    $region10: #{tpu_custom_call.1} parent=1 // pred_check
      _
    $region11: #{tpu_custom_call.1} parent=1 // pred_check_branch
      %35 = sbr.rel (0) target = $region13
    $region12: #{tpu_custom_call.1} parent=1 // pred_region
      %36 = dma.done [#allocation4], 256
    $region13: #{tpu_custom_call.1} parent=1 // pred_fallthru
      _
    // Predicated region
    $region14: #{tpu_custom_call.1} parent=1 // pred_check
      _
    $region15: #{tpu_custom_call.1} parent=1 // pred_check_branch
      %38 = sbr.rel (0) target = $region17
    $region16: #{tpu_custom_call.1} parent=1 // pred_region
      %39 = dma.done [#allocation7], 256
    $region17: #{tpu_custom_call.1} parent=1 // pred_fallthru
      _
    %p40 = scmp.eq.s32.totalorder 0, 0
    // Predicated region
    $region18: #{tpu_custom_call.1} parent=1 // pred_check
      %p41 = pneg %p40
    $region19: #{tpu_custom_call.1} parent=1 // pred_check_branch
      %43 = sbr.rel (%p41) target = $region21
    $region20: #{tpu_custom_call.1} parent=1 // pred_region
      %44 = vst [vmem:[#allocation2] sm:$0xff] 0.0
    $region21: #{tpu_custom_call.1} parent=1 // pred_fallthru
      _
    %v45 = vld [vmem:[#allocation3] sm:$0xff]
    %v46 = vld [vmem:[#allocation3 + $0x8] sm:$0xff]
    %v47 = vld [vmem:[#allocation6] sm:$0xff]
    %v48 = vld [vmem:[#allocation6 + $0x8] sm:$0xff]
    %v51 = vcombine.high %v47, %v47
    %v52 = vcombine.high %v48, %v48
    %vm55 = vcmask 1043456
    %v56 = vsel %vm55, %v47, 0.0
    %v57 = vrot.slane %v56, 4
    %v58 = vadd.f32 %v56, %v57
    %v59 = vrot.slane %v58, 2
    %v60 = vadd.f32 %v58, %v59
    %v61 = vrot.slane %v60, 1
    %v62 = vadd.f32 %v60, %v61
    %v63 = vsel %vm55, %v51, 0.0
    %v64 = vrot.slane %v63, 4
    %v65 = vadd.f32 %v63, %v64
    %v66 = vrot.slane %v65, 2
    %v67 = vadd.f32 %v65, %v66
    %v68 = vrot.slane %v67, 1
    %v69 = vadd.f32 %v67, %v68
    %v70 = vsel %vm55, %v48, 0.0
    %v71 = vrot.slane %v70, 4
    %v72 = vadd.f32 %v70, %v71
    %v73 = vrot.slane %v72, 2
    %v74 = vadd.f32 %v72, %v73
    %v75 = vrot.slane %v74, 1
    %v76 = vadd.f32 %v74, %v75
    %v77 = vsel %vm55, %v52, 0.0
    %v78 = vrot.slane %v77, 4
    %v79 = vadd.f32 %v77, %v78
    %v80 = vrot.slane %v79, 2
    %v81 = vadd.f32 %v79, %v80
    %v82 = vrot.slane %v81, 1
    %v83 = vadd.f32 %v81, %v82
    %vm84 = vcmp.gt.f32.partialorder %v62, 1e-09
    %vm85 = vcmp.gt.f32.partialorder %v69, 1e-09
    %vm86 = vcmp.gt.f32.partialorder %v76, 1e-09
    %vm87 = vcmp.gt.f32.partialorder %v83, 1e-09
    %v88 = vsub.f32 %v45, %v47
    %v89 = vsub.f32 %v46, %v48
    %v90 = vand.u32 2147483647, %v88
    %v91 = vand.u32 2147483647, %v89
    %v92 = vsel %vm84, 1, 0
    %v93 = vsel %vm85, 1, 0
    %v94 = vsel %vm86, 1, 0
    %v95 = vsel %vm87, 1, 0
    %vm96 = vcmp.eq.s32.totalorder %v92, 1
    %vm97 = vcmp.eq.s32.totalorder %v93, 1
    %vm98 = vcmp.eq.s32.totalorder %v94, 1
    %vm99 = vcmp.eq.s32.totalorder %v95, 1
    %v102 = vcombine.high %v90, %v90
    %v103 = vcombine.high %v91, %v91
    %v106 = vsel %vm96, %v90, 0.0
    %v107 = vsel %vm97, %v102, 0.0
    %v108 = vsel %vm98, %v91, 0.0
    %v109 = vsel %vm99, %v103, 0.0
    %v110 = vld [vmem:[#allocation2] sm:$0xff]
    %v111 = vsel %vm55, %v106, 0.0
    %v112 = vsel %vm55, %v108, 0.0
    %v113 = vadd.f32 %v111, %v112
    %v114 = vsel %vm55, %v107, 0.0
    %v115 = vsel %vm55, %v109, 0.0
    %v116 = vadd.f32 %v114, %v115
    %v119 = vcombine.low %v113, %v116
    %v121 = vadd.f32 %v110, %v119
    %122 = vst [vmem:[#allocation2] sm:$0xff] %v121
    // Predicated region
    $region22: #{tpu_custom_call.1} parent=1 // pred_check
      %p123 = pneg %p40
    $region23: #{tpu_custom_call.1} parent=1 // pred_check_branch
      %125 = sbr.rel (%p123) target = $region25
    $region24: #{tpu_custom_call.1} parent=1 // pred_region
      %v126 = vld [vmem:[#allocation2] sm:$0xff]
      %v128 = vcombine.high %v126, %v126
      %v130 = vsel %vm55, %v126, 0.0
      %v131 = vsel %vm55, %v128, 0.0
      %v132 = vadd.f32 %v130, %v131
      %133 = vadd.xlane.f32.xlu0 %v132
      %v134 = vpop.xlane.xlu0 %133
      %v135 = vrot.slane %v134, 4
      %v136 = vadd.f32 %v134, %v135
      %v137 = vrot.slane %v136, 2
      %v138 = vadd.f32 %v136, %v137
      %v139 = vrot.slane %v138, 1
      %v140 = vadd.f32 %v138, %v139
      %s141 = vtos %v140
      %v142 = vstv %s141
      %143 = vst [vmem:[#allocation8] sm:$0xff] %v142
    $region25: #{tpu_custom_call.1} parent=1 // pred_fallthru
      _
    // Predicated region
    $region26: #{tpu_custom_call.1} parent=1 // pred_check
      _
    $region27: #{tpu_custom_call.1} parent=1 // pred_check_branch
      %145 = sbr.rel (0) target = $region29
    $region28: #{tpu_custom_call.1} parent=1 // pred_region
      %s147 = ssub.s32 128, 128
      %148 = vsyncadd [#allocation5], %s147
      %s150 = sshll.u32 [#allocation8], 4
      %s151 = int_to_ptr.vmem [resolvable:$true] %s150
      %153 = dma.vmem_to_hbm [thread:$0]  %s151, 128, %s2, [#allocation5]
    $region29: #{tpu_custom_call.1} parent=1 // pred_fallthru
      _
    // Predicated region
    $region30: #{tpu_custom_call.1} parent=1 // pred_check
      _
    $region31: #{tpu_custom_call.1} parent=1 // pred_check_branch
      %155 = sbr.rel (0) target = $region33
    $region32: #{tpu_custom_call.1} parent=1 // pred_region
      %156 = dma.done [#allocation5], 128
    $region33: #{tpu_custom_call.1} parent=1 // pred_fallthru
      _
    %157 = vsyncpa [#allocation4], 1
    %158 = vsyncpa [#allocation7], 1
    %159 = vsyncpa [#allocation5], 1

</llo_original>
